<compile_context>
chip_gen: v7x
topology: tpu7x:2x2x1
jax: 0.10.0
libtpu: 0.0.40
codegen_flags: <defaults>
</compile_context>

<pallas_src>
import functools

import jax
import jax.numpy as jnp
from jax.experimental import pallas as pl
from jax.experimental.pallas import tpu as pltpu


def _gpn_kernel(x_ref, v_ref, vreset_ref, w_ref, b_ref, spike_ref, vnew_ref,
                *, C: int):
    x = x_ref[...]                      # [TM, C] float32
    v = v_ref[...]                      # [TM, C]

    # One fused matmul with K = 2C:  z = cat([v, x], 1) @ W_t + b  -> [TM, 3C]
    vx = jnp.concatenate([v, x], axis=1)                      # [TM, 2C]
    z = jnp.dot(vx, w_ref[...], preferred_element_type=jnp.float32)
    z = z + b_ref[...]                                        # [1, 3C] broadcast

    # Lane slices are aligned (free) when C is a multiple of 128.
    f = jax.nn.sigmoid(z[:, 0 * C:1 * C])
    i = jax.nn.sigmoid(z[:, 1 * C:2 * C])
    t = jax.nn.sigmoid(z[:, 2 * C:3 * C])

    v_hidden = f * v + i * x
    fired = v_hidden >= t               # surrogate.ATan forward == Heaviside
    spike = fired.astype(jnp.float32)
    v_new = jnp.where(fired, vreset_ref[...], v_hidden)

    spike_ref[...] = spike
    vnew_ref[...] = v_new


def prepare_params(W, b):
    """One-time (per model, NOT per timestep) weight preparation.

    W : [3C, 2C]  PyTorch nn.Linear weight layout
    b : [3C]
    Returns (W_t [2C, 3C], b2d [1, 3C]) in the kernel's layout.
    """
    Wt = jnp.asarray(W).T
    b2d = jnp.asarray(b).reshape(1, -1)
    return Wt, b2d


@functools.partial(jax.jit, static_argnames=("block_m",))
def gpn_wo_b_forward(x, v, v_reset, Wt, b2d, *, block_m: int = 128):
    """One neuron step.

    x, v, v_reset : [N, C] float32
    Wt            : [2C, 3C] float32 (prepared once via prepare_params)
    b2d           : [1, 3C]  float32
    Returns (spike, v_new), each [N, C] float32.
    """
    N, C = x.shape
    assert Wt.shape == (2 * C, 3 * C), "Wt must be [2C, 3C] (pre-transposed)"
    assert b2d.shape == (1, 3 * C)

    tm = min(block_m, N)
    assert N % tm == 0, "batch must be divisible by the batch tile size"
    # Best layout when C % 128 == 0 (lane-aligned gate slices); still correct otherwise.

    kernel = functools.partial(_gpn_kernel, C=C)

    f32 = 4
    # VMEM: single-buffered weight + bias, double-buffered activation tiles
    # (3 inputs + 2 outputs), plus vx/z intermediates. 2x headroom.
    vmem_est = f32 * (
        (2 * C) * (3 * C)            # weights (Buffered(1))
        + 3 * C                      # bias
        + 2 * 5 * tm * C             # activations, double-buffered
        + tm * (2 * C + 3 * C)       # vx + z temporaries
    )
    vmem_limit = int(max(2 * vmem_est, 16 * 1024 * 1024))

    cost = pl.CostEstimate(
        flops=2 * N * (2 * C) * (3 * C),
        transcendentals=3 * N * C,
        bytes_accessed=f32 * (5 * N * C + (2 * C) * (3 * C) + 3 * C),
    )

    act_spec = pl.BlockSpec((tm, C), lambda i: (i, 0))
    # Grid-invariant operands: single buffer (index_map constant over the grid).
    w_spec = pl.BlockSpec((2 * C, 3 * C), lambda i: (0, 0),
                          pipeline_mode=pl.Buffered(buffer_count=1))
    b_spec = pl.BlockSpec((1, 3 * C), lambda i: (0, 0),
                          pipeline_mode=pl.Buffered(buffer_count=1))

    spike, v_new = pl.pallas_call(
        kernel,
        out_shape=(
            jax.ShapeDtypeStruct((N, C), jnp.float32),
            jax.ShapeDtypeStruct((N, C), jnp.float32),
        ),
        grid=(N // tm,),
        in_specs=[act_spec, act_spec, act_spec, w_spec, b_spec],
        out_specs=(act_spec, act_spec),
        compiler_params=pltpu.CompilerParams(
            dimension_semantics=("parallel",),
            vmem_limit_bytes=vmem_limit,
        ),
        cost_estimate=cost,
    )(x, v, v_reset, Wt, b2d)
    return spike, v_new


def _reference(x, v, v_reset, Wt, b2d):
    """Pure-JAX reference with the same accumulation order as the kernel."""
    C = x.shape[1]
    z = jnp.concatenate([v, x], axis=1) @ Wt + b2d
    f = jax.nn.sigmoid(z[:, :C])
    i = jax.nn.sigmoid(z[:, C:2 * C])
    t = jax.nn.sigmoid(z[:, 2 * C:])
    v_hidden = f * v + i * x
    fired = v_hidden >= t
    spike = fired.astype(jnp.float32)
    v_new = jnp.where(fired, v_reset, v_hidden)
    margin = jnp.abs(v_hidden - t)   # distance to the spike threshold
    return spike, v_new, margin


def _check(spike, v_new, spike_ref, v_new_ref, margin, tag):
    # Hard-threshold spikes may legitimately flip when |v_hidden - t| ~ ulp;
    # only require agreement away from the threshold boundary.
    agree = spike == spike_ref
    near_thresh = margin < 1e-5
    assert bool(jnp.all(agree | near_thresh)), f"{tag}: spike mismatch"
    vdiff = jnp.abs(v_new - v_new_ref)
    assert bool(jnp.all(jnp.where(agree, vdiff <= 1e-4, True))), f"{tag}: v_new mismatch"


if __name__ == "__main__":
    # Small deterministic setup: batch=256 (two 128-row grid steps), C=128.
    N, C = 256, 128
    key = jax.random.PRNGKey(0)
    kx, kw, kb = jax.random.split(key, 3)

    x = jax.random.normal(kx, (N, C), dtype=jnp.float32)

    # nn.Linear(2C, 3C) default init: U(-bound, bound), bound = 1/sqrt(fan_in).
    bound = 1.0 / jnp.sqrt(jnp.float32(2 * C))
    W = jax.random.uniform(kw, (3 * C, 2 * C), jnp.float32, -bound, bound)
    b = jax.random.uniform(kb, (3 * C,), jnp.float32, -bound, bound)

    # Eval-mode first-call state: v_reset = 0, v = v_reset, spike = 0.
    v = jnp.zeros((N, C), jnp.float32)
    v_reset = jnp.zeros((N, C), jnp.float32)

    # One-time weight preparation (hoisted out of the per-timestep path).
    Wt, b2d = prepare_params(W, b)

    # Step 1 (zero membrane potential).
    spike1, v1 = gpn_wo_b_forward(x, v, v_reset, Wt, b2d, block_m=128)
    jax.block_until_ready((spike1, v1))
    s1_ref, v1_ref, m1 = _reference(x, v, v_reset, Wt, b2d)
    _check(spike1, v1, s1_ref, v1_ref, m1, "step1")

    # Step 2 (recurrent state: non-zero membrane potential).
    spike2, v2 = gpn_wo_b_forward(x, v1, v_reset, Wt, b2d, block_m=128)
    jax.block_until_ready((spike2, v2))
    s2_ref, v2_ref, m2 = _reference(x, v1_ref, v_reset, Wt, b2d)
    _check(spike2, v2, s2_ref, v2_ref, m2, "step2")

    print("KERNEL_OK")
</pallas_src>

<mosaic_0001>
module attributes {stable_mosaic.version = 11 : i64} {
  func.func @_gpn_kernel(%arg0: i32, %arg1: memref<128x128xf32, #tpu.memory_space<vmem>>, %arg2: memref<128x128xf32, #tpu.memory_space<vmem>>, %arg3: memref<128x128xf32, #tpu.memory_space<vmem>>, %arg4: memref<256x384xf32, #tpu.memory_space<vmem>>, %arg5: memref<1x384xf32, #tpu.memory_space<vmem>>, %arg6: memref<128x128xf32, #tpu.memory_space<vmem>>, %arg7: memref<128x128xf32, #tpu.memory_space<vmem>>) attributes {dimension_semantics = [#tpu.dimension_semantics<parallel>], iteration_bounds = array<i64: 2>, scalar_prefetch = 0 : i64, scratch_operands = 0 : i64, tpu.core_type = #tpu.core_type<tc>, window_params = [{transform_indices = @transform_0, window_bounds = array<i64: 128, 128>}, {transform_indices = @transform_1, window_bounds = array<i64: 128, 128>}, {transform_indices = @transform_2, window_bounds = array<i64: 128, 128>}, {pipeline_mode = #tpu.pipeline_mode<synchronous>, transform_indices = @transform_3, window_bounds = array<i64: 256, 384>}, {pipeline_mode = #tpu.pipeline_mode<synchronous>, transform_indices = @transform_4, window_bounds = array<i64: 1, 384>}, {transform_indices = @transform_5, window_bounds = array<i64: 128, 128>}, {transform_indices = @transform_6, window_bounds = array<i64: 128, 128>}]} {
    %c0 = arith.constant 0 : index
    %c0_0 = arith.constant 0 : index
    %0 = vector.load %arg1[%c0, %c0_0] : memref<128x128xf32, #tpu.memory_space<vmem>>, vector<128x128xf32>
    %c0_1 = arith.constant 0 : index
    %c0_2 = arith.constant 0 : index
    %1 = vector.load %arg2[%c0_1, %c0_2] : memref<128x128xf32, #tpu.memory_space<vmem>>, vector<128x128xf32>
    %2 = tpu.concatenate %1, %0 in 1 : vector<128x128xf32>, vector<128x128xf32> -> vector<128x256xf32>
    %c0_3 = arith.constant 0 : index
    %c0_4 = arith.constant 0 : index
    %3 = vector.load %arg4[%c0_3, %c0_4] : memref<256x384xf32, #tpu.memory_space<vmem>>, vector<256x384xf32>
    %cst = arith.constant dense<0.000000e+00> : vector<128x384xf32>
    %4 = tpu.matmul %2, %3, %cst {dimension_numbers = #tpu.dot_dimension_numbers<[1], [0], [0], [1], [0, 0, 1, 1], [], []>} : vector<128x256xf32>, vector<256x384xf32>, vector<128x384xf32> -> vector<128x384xf32>
    %c0_5 = arith.constant 0 : index
    %c0_6 = arith.constant 0 : index
    %5 = vector.load %arg5[%c0_5, %c0_6] : memref<1x384xf32, #tpu.memory_space<vmem>>, vector<1x384xf32>
    %6 = vector.broadcast %5 : vector<1x384xf32> to vector<128x384xf32>
    %7 = arith.addf %4, %6 : vector<128x384xf32>
    %8 = vector.extract_strided_slice %7 {offsets = [0, 0], sizes = [128, 128], strides = [1, 1]} : vector<128x384xf32> to vector<128x128xf32>
    %9 = arith.negf %8 : vector<128x128xf32>
    %10 = math.exp %9 : vector<128x128xf32>
    %cst_7 = arith.constant 1.000000e+00 : f32
    %11 = vector.broadcast %cst_7 : f32 to vector<128x128xf32>
    %12 = arith.addf %11, %10 : vector<128x128xf32>
    %13 = arith.divf %11, %12 : vector<128x128xf32>
    %14 = vector.extract_strided_slice %7 {offsets = [0, 128], sizes = [128, 128], strides = [1, 1]} : vector<128x384xf32> to vector<128x128xf32>
    %15 = arith.negf %14 : vector<128x128xf32>
    %16 = math.exp %15 : vector<128x128xf32>
    %cst_8 = arith.constant 1.000000e+00 : f32
    %17 = vector.broadcast %cst_8 : f32 to vector<128x128xf32>
    %18 = arith.addf %17, %16 : vector<128x128xf32>
    %19 = arith.divf %17, %18 : vector<128x128xf32>
    %20 = vector.extract_strided_slice %7 {offsets = [0, 256], sizes = [128, 128], strides = [1, 1]} : vector<128x384xf32> to vector<128x128xf32>
    %21 = arith.negf %20 : vector<128x128xf32>
    %22 = math.exp %21 : vector<128x128xf32>
    %cst_9 = arith.constant 1.000000e+00 : f32
    %23 = vector.broadcast %cst_9 : f32 to vector<128x128xf32>
    %24 = arith.addf %23, %22 : vector<128x128xf32>
    %25 = arith.divf %23, %24 : vector<128x128xf32>
    %26 = arith.mulf %13, %1 : vector<128x128xf32>
    %27 = arith.mulf %19, %0 : vector<128x128xf32>
    %28 = arith.addf %26, %27 : vector<128x128xf32>
    %29 = arith.cmpf oge, %28, %25 : vector<128x128xf32>
    %30 = arith.extui %29 : vector<128x128xi1> to vector<128x128xi32>
    %31 = arith.sitofp %30 : vector<128x128xi32> to vector<128x128xf32>
    %c0_10 = arith.constant 0 : index
    %c0_11 = arith.constant 0 : index
    %32 = vector.load %arg3[%c0_10, %c0_11] : memref<128x128xf32, #tpu.memory_space<vmem>>, vector<128x128xf32>
    %33 = arith.select %29, %32, %28 : vector<128x128xi1>, vector<128x128xf32>
    %c0_12 = arith.constant 0 : index
    %c0_13 = arith.constant 0 : index
    %34 = vector.load %arg6[%c0_12, %c0_13] : memref<128x128xf32, #tpu.memory_space<vmem>>, vector<128x128xf32>
    tpu.vector_store %arg6[%c0_12, %c0_13], %31 {strides = array<i32>} : memref<128x128xf32, #tpu.memory_space<vmem>>, vector<128x128xf32>,
    %c0_14 = arith.constant 0 : index
    %c0_15 = arith.constant 0 : index
    %35 = vector.load %arg7[%c0_14, %c0_15] : memref<128x128xf32, #tpu.memory_space<vmem>>, vector<128x128xf32>
    tpu.vector_store %arg7[%c0_14, %c0_15], %33 {strides = array<i32>} : memref<128x128xf32, #tpu.memory_space<vmem>>, vector<128x128xf32>,
    return
  }
  func.func @transform_0(%arg0: i32) -> (i32, i32) {
    %c0_i32 = arith.constant 0 : i32
    %c0_i32_0 = arith.constant 0 : i32
    return %arg0, %c0_i32 : i32, i32
  }
  func.func @transform_1(%arg0: i32) -> (i32, i32) {
    %c0_i32 = arith.constant 0 : i32
    %c0_i32_0 = arith.constant 0 : i32
    return %arg0, %c0_i32 : i32, i32
  }
  func.func @transform_2(%arg0: i32) -> (i32, i32) {
    %c0_i32 = arith.constant 0 : i32
    %c0_i32_0 = arith.constant 0 : i32
    return %arg0, %c0_i32 : i32, i32
  }
  func.func @transform_3(%arg0: i32) -> (i32, i32) {
    %c0_i32 = arith.constant 0 : i32
    %c0_i32_0 = arith.constant 0 : i32
    %c0_i32_1 = arith.constant 0 : i32
    return %c0_i32, %c0_i32_0 : i32, i32
  }
  func.func @transform_4(%arg0: i32) -> (i32, i32) {
    %c0_i32 = arith.constant 0 : i32
    %c0_i32_0 = arith.constant 0 : i32
    %c0_i32_1 = arith.constant 0 : i32
    return %c0_i32, %c0_i32_0 : i32, i32
  }
  func.func @transform_5(%arg0: i32) -> (i32, i32) {
    %c0_i32 = arith.constant 0 : i32
    %c0_i32_0 = arith.constant 0 : i32
    return %arg0, %c0_i32 : i32, i32
  }
  func.func @transform_6(%arg0: i32) -> (i32, i32) {
    %c0_i32 = arith.constant 0 : i32
    %c0_i32_0 = arith.constant 0 : i32
    return %arg0, %c0_i32 : i32, i32
  }
}

</mosaic_0001>

<llo_original>
// kernel: gpn_wo_b_forward.1
$region0: #{gpn_wo_b_forward.1}
  #allocation0 [shape = 'u32[]', space=smem, size = 0x4, offset = 0x4, fixed_abs, tag = 'smem constant byte address 0x4 - core index']
  #allocation1 [shape = 'u32[144,128]{1,0:T(1,128)}', space=vmem, size = 0x12000, scoped, tag = 'internal scratch']
  %s0 = inlined_call_operand.hbm [shape: f32[256,128], index: 0, kind: input, shape index: {}]
  %s1 = inlined_call_operand.hbm [shape: f32[256,128], index: 1, kind: input, shape index: {}]
  %s2 = inlined_call_operand.hbm [shape: f32[256,128], index: 2, kind: input, shape index: {}]
  %s3 = inlined_call_operand.hbm [shape: f32[256,384], index: 3, kind: input, shape index: {}]
  %s4 = inlined_call_operand.vmem [shape: f32[1,384], index: 4, kind: input, shape index: {}]
  %s5 = inlined_call_operand.hbm [shape: f32[256,128], index: 5, kind: output, shape index: {0}]
  %s6 = inlined_call_operand.hbm [shape: f32[256,128], index: 6, kind: output, shape index: {1}]
  %7 = xla_tuple %s5, %s6
  %s8 = sld [smem:[#allocation0]]
  $region77: #{gpn_wo_b_forward.1} parent=0
    _
  %s10 = ssub.s32 1, %s8
  %s11 = scalar_select 0, %s10, %s8
  $region1: #{gpn_wo_b_forward.1} parent=0
    #allocation2 [shape = 'u8[131072]{0}', space=vmem, size = 0x20000, scoped, tag = 'input window, operand 0']
    #allocation3 [shape = 's32[2]{0}', space=sflag, size = 0x8, scoped, tag = 'scoped memory for gpn_wo_b_forward.1']
    #allocation4 [shape = 's32[2]{0}', space=sflag, size = 0x8, scoped, tag = 'scoped memory for gpn_wo_b_forward.1']
    #allocation5 [shape = 'u8[131072]{0}', space=vmem, size = 0x20000, scoped, tag = 'input window, operand 1']
    #allocation6 [shape = 's32[2]{0}', space=sflag, size = 0x8, scoped, tag = 'scoped memory for gpn_wo_b_forward.1']
    #allocation7 [shape = 'u8[131072]{0}', space=vmem, size = 0x20000, scoped, tag = 'input window, operand 2']
    #allocation8 [shape = 'u8[393216]{0}', space=vmem, size = 0x60000, scoped, tag = 'input window, operand 3, single buffered']
    #allocation9 [shape = 's32[1]{0}', space=sflag, size = 0x4, scoped, tag = 'scoped memory for gpn_wo_b_forward.1']
    #allocation10 [shape = 'u8[131072]{0}', space=vmem, size = 0x20000, scoped, tag = 'output window, operand 0']
    #allocation11 [shape = 'u8[131072]{0}', space=vmem, size = 0x20000, scoped, tag = 'output window, operand 1']
    #allocation12 [shape = 's32[2]{0}', space=sflag, size = 0x8, scoped, tag = 'scoped memory for gpn_wo_b_forward.1']
    %12 = vsyncpa [#allocation3], 0
    %s13 = scalar_lea.sflag [#allocation3], 1
    %14 = vsyncpa %s13, 0
    %15 = vsyncpa [#allocation6], 0
    %s16 = scalar_lea.sflag [#allocation6], 1
    %17 = vsyncpa %s16, 0
    %18 = vsyncpa [#allocation9], 0
    %19 = vsyncpa [#allocation4], 0
    %s20 = scalar_lea.sflag [#allocation4], 1
    %21 = vsyncpa %s20, 0
    %22 = vsyncpa [#allocation12], 0
    %s23 = scalar_lea.sflag [#allocation12], 1
    %24 = vsyncpa %s23, 0
    loop: start=0, step=1, limit=4
    $region2: #{gpn_wo_b_forward.1} parent=1 // loop_pre_header
      _
    $region3: #{gpn_wo_b_forward.1} parent=1 // loop_header
      %s26 = sphi 0, %s30
      %p27 = scmp.ge.s32.totalorder %s26, 4
      %s36 = sphi 0, %s38
      %s39 = sphi 0, %s36
      %s40 = sphi 0, %s39
      %s56 = sphi 0, %s40
      %s62 = sphi 0, %s64
      %s65 = sphi 0, %s62
      %s66 = sphi 0, %s65
      %s82 = sphi 0, %s66
      %s88 = sphi 0, %s90
      %s91 = sphi 0, %s88
      %s92 = sphi 0, %s91
      %s108 = sphi 0, %s92
      %s112 = sphi 0, %s112
      %s114 = sphi 0, %s112
      %s115 = sphi 0, %s114
      %s129 = sphi 0, %s115
      %s133 = sphi 0, %s133
      %s135 = sphi 0, %s133
      %s136 = sphi 0, %s135
      %s150 = sphi 0, %s136
      %s156 = sphi 0, %s158
      %s159 = sphi 0, %s156
      %s160 = sphi 0, %s159
      %s176 = sphi 0, %s160
      %s182 = sphi 0, %s184
      %s185 = sphi 0, %s182
      %s186 = sphi 0, %s185
      %s202 = sphi 0, %s186
    $region4: #{gpn_wo_b_forward.1} parent=1 // loop_header_branch
      %29 = sbr.rel (%p27) target = $region8
    $region5: #{gpn_wo_b_forward.1} parent=1 // loop_body
      %s31 = ssub.s32 %s26, 1
      %s32 = ssub.s32 %s26, 2
      %s33 = sadd.s32 %s26, 1
      %s34 = ssub.s32 %s26, %s33
      %p35 = scmp.eq.s32.totalorder %s34, 0
      %s37 = sadd.s32 %s36, 1
      %s38 = scalar_select %p35, %s36, %s37
      %p41 = pneg %p35
      %p42 = scmp.eq.s32.totalorder %s26, 1
      %p43 = por %p41, %p42
      %p44 = scmp.ne.s32.totalorder %s36, %s39
      %p45 = scmp.eq.s32.totalorder %s26, 0
      %p46 = por %p44, %p45
      %p47 = scmp.ne.s32.totalorder %s36, %s39
      %p48 = scmp.eq.s32.totalorder %s31, 1
      %p49 = por %p47, %p48
      %p50 = scmp.ne.s32.totalorder %s39, %s40
      %p51 = scmp.eq.s32.totalorder %s31, 0
      %p52 = por %p50, %p51
      %p53 = scmp.ne.s32.totalorder %s39, %s40
      %p54 = scmp.eq.s32.totalorder %s32, 1
      %p55 = por %p53, %p54
      %p57 = scmp.ne.s32.totalorder %s40, %s56
      %p58 = scmp.eq.s32.totalorder %s32, 0
      %p59 = por %p57, %p58
      %s60 = ssub.s32 %s26, %s33
      %p61 = scmp.eq.s32.totalorder %s60, 0
      %s63 = sadd.s32 %s62, 1
      %s64 = scalar_select %p61, %s62, %s63
      %p67 = pneg %p61
      %p68 = scmp.eq.s32.totalorder %s26, 1
      %p69 = por %p67, %p68
      %p70 = scmp.ne.s32.totalorder %s62, %s65
      %p71 = scmp.eq.s32.totalorder %s26, 0
      %p72 = por %p70, %p71
      %p73 = scmp.ne.s32.totalorder %s62, %s65
      %p74 = scmp.eq.s32.totalorder %s31, 1
      %p75 = por %p73, %p74
      %p76 = scmp.ne.s32.totalorder %s65, %s66
      %p77 = scmp.eq.s32.totalorder %s31, 0
      %p78 = por %p76, %p77
      %p79 = scmp.ne.s32.totalorder %s65, %s66
      %p80 = scmp.eq.s32.totalorder %s32, 1
      %p81 = por %p79, %p80
      %p83 = scmp.ne.s32.totalorder %s66, %s82
      %p84 = scmp.eq.s32.totalorder %s32, 0
      %p85 = por %p83, %p84
      %s86 = ssub.s32 %s26, %s33
      %p87 = scmp.eq.s32.totalorder %s86, 0
      %s89 = sadd.s32 %s88, 1
      %s90 = scalar_select %p87, %s88, %s89
      %p93 = pneg %p87
      %p94 = scmp.eq.s32.totalorder %s26, 1
      %p95 = por %p93, %p94
      %p96 = scmp.ne.s32.totalorder %s88, %s91
      %p97 = scmp.eq.s32.totalorder %s26, 0
      %p98 = por %p96, %p97
      %p99 = scmp.ne.s32.totalorder %s88, %s91
      %p100 = scmp.eq.s32.totalorder %s31, 1
      %p101 = por %p99, %p100
      %p102 = scmp.ne.s32.totalorder %s91, %s92
      %p103 = scmp.eq.s32.totalorder %s31, 0
      %p104 = por %p102, %p103
      %p105 = scmp.ne.s32.totalorder %s91, %s92
      %p106 = scmp.eq.s32.totalorder %s32, 1
      %p107 = por %p105, %p106
      %p109 = scmp.ne.s32.totalorder %s92, %s108
      %p110 = scmp.eq.s32.totalorder %s32, 0
      %p111 = por %p109, %p110
      %s113 = sadd.s32 %s112, 1
      %p116 = scmp.eq.s32.totalorder %s26, 1
      %p117 = scmp.ne.s32.totalorder %s112, %s114
      %p118 = scmp.eq.s32.totalorder %s26, 0
      %p119 = por %p117, %p118
      %p120 = scmp.ne.s32.totalorder %s112, %s114
      %p121 = scmp.eq.s32.totalorder %s31, 1
      %p122 = por %p120, %p121
      %p123 = scmp.ne.s32.totalorder %s114, %s115
      %p124 = scmp.eq.s32.totalorder %s31, 0
      %p125 = por %p123, %p124
      %p126 = scmp.ne.s32.totalorder %s114, %s115
      %p127 = scmp.eq.s32.totalorder %s32, 1
      %p128 = por %p126, %p127
      %p130 = scmp.ne.s32.totalorder %s115, %s129
      %p131 = scmp.eq.s32.totalorder %s32, 0
      %p132 = por %p130, %p131
      %s134 = sadd.s32 %s133, 1
      %p137 = scmp.eq.s32.totalorder %s26, 1
      %p138 = scmp.ne.s32.totalorder %s133, %s135
      %p139 = scmp.eq.s32.totalorder %s26, 0
      %p140 = por %p138, %p139
      %p141 = scmp.ne.s32.totalorder %s133, %s135
      %p142 = scmp.eq.s32.totalorder %s31, 1
      %p143 = por %p141, %p142
      %p144 = scmp.ne.s32.totalorder %s135, %s136
      %p145 = scmp.eq.s32.totalorder %s31, 0
      %p146 = por %p144, %p145
      %p147 = scmp.ne.s32.totalorder %s135, %s136
      %p148 = scmp.eq.s32.totalorder %s32, 1
      %p149 = por %p147, %p148
      %p151 = scmp.ne.s32.totalorder %s136, %s150
      %p152 = scmp.eq.s32.totalorder %s32, 0
      %p153 = por %p151, %p152
      %s154 = ssub.s32 %s26, %s33
      %p155 = scmp.eq.s32.totalorder %s154, 0
      %s157 = sadd.s32 %s156, 1
      %s158 = scalar_select %p155, %s156, %s157
      %p161 = pneg %p155
      %p162 = scmp.eq.s32.totalorder %s26, 1
      %p163 = por %p161, %p162
      %p164 = scmp.ne.s32.totalorder %s156, %s159
      %p165 = scmp.eq.s32.totalorder %s26, 0
      %p166 = por %p164, %p165
      %p167 = scmp.ne.s32.totalorder %s156, %s159
      %p168 = scmp.eq.s32.totalorder %s31, 1
      %p169 = por %p167, %p168
      %p170 = scmp.ne.s32.totalorder %s159, %s160
      %p171 = scmp.eq.s32.totalorder %s31, 0
      %p172 = por %p170, %p171
      %p173 = scmp.ne.s32.totalorder %s159, %s160
      %p174 = scmp.eq.s32.totalorder %s32, 1
      %p175 = por %p173, %p174
      %p177 = scmp.ne.s32.totalorder %s160, %s176
      %p178 = scmp.eq.s32.totalorder %s32, 0
      %p179 = por %p177, %p178
      %s180 = ssub.s32 %s26, %s33
      %p181 = scmp.eq.s32.totalorder %s180, 0
      %s183 = sadd.s32 %s182, 1
      %s184 = scalar_select %p181, %s182, %s183
      %p187 = pneg %p181
      %p188 = scmp.eq.s32.totalorder %s26, 1
      %p189 = por %p187, %p188
      %p190 = scmp.ne.s32.totalorder %s182, %s185
      %p191 = scmp.eq.s32.totalorder %s26, 0
      %p192 = por %p190, %p191
      %p193 = scmp.ne.s32.totalorder %s182, %s185
      %p194 = scmp.eq.s32.totalorder %s31, 1
      %p195 = por %p193, %p194
      %p196 = scmp.ne.s32.totalorder %s185, %s186
      %p197 = scmp.eq.s32.totalorder %s31, 0
      %p198 = por %p196, %p197
      %p199 = scmp.ne.s32.totalorder %s185, %s186
      %p200 = scmp.eq.s32.totalorder %s32, 1
      %p201 = por %p199, %p200
      %p203 = scmp.ne.s32.totalorder %s186, %s202
      %p204 = scmp.eq.s32.totalorder %s32, 0
      %p205 = por %p203, %p204
      %p206 = scmp.le.s32.totalorder 1, %s26
      %p207 = scmp.lt.s32.totalorder %s26, 3
      %p208 = pnand %p206, %p207
      %p209 = pneg %p208
      // Predicated region
      $region9: #{gpn_wo_b_forward.1} parent=5 // pred_check
        _
      $region10: #{gpn_wo_b_forward.1} parent=5 // pred_check_branch
        %211 = sbr.rel (%p208) target = $region12
      $region11: #{gpn_wo_b_forward.1} parent=5 // pred_region
        %s212 = ssub.s32 %s26, 1
        // Predicated region
        $region13: #{gpn_wo_b_forward.1} parent=11 // pred_check
          %p213 = pneg %p125
        $region14: #{gpn_wo_b_forward.1} parent=11 // pred_check_branch
          %215 = sbr.rel (%p213) target = $region16
        $region15: #{gpn_wo_b_forward.1} parent=11 // pred_region
          %s217 = ssub.s32 12288, 12288
          %218 = vsyncadd [#allocation9], %s217
          %s219 = sshll.u32 [#allocation8], 4
          %s220 = int_to_ptr.vmem [resolvable:$true] %s219
          %225 = dma.hbm_to_vmem [thread:$0]  %s3, 12288, %s220, [#allocation9], 384, 384, 24
        $region16: #{gpn_wo_b_forward.1} parent=11 // pred_fallthru
          _
        // Predicated region
        $region17: #{gpn_wo_b_forward.1} parent=11 // pred_check
          %p226 = pneg %p146
        $region18: #{gpn_wo_b_forward.1} parent=11 // pred_check_branch
          %228 = sbr.rel (%p226) target = $region20
        $region19: #{gpn_wo_b_forward.1} parent=11 // pred_region
          _
        $region20: #{gpn_wo_b_forward.1} parent=11 // pred_fallthru
          _
      $region12: #{gpn_wo_b_forward.1} parent=5 // pred_fallthru
        _
      %p229 = scmp.lt.s32.totalorder %s26, 2
      // Predicated region
      $region21: #{gpn_wo_b_forward.1} parent=5 // pred_check
        %p230 = pneg %p229
      $region22: #{gpn_wo_b_forward.1} parent=5 // pred_check_branch
        %232 = sbr.rel (%p230) target = $region24
      $region23: #{gpn_wo_b_forward.1} parent=5 // pred_region
        // Predicated region
        $region25: #{gpn_wo_b_forward.1} parent=23 // pred_check
          %p233 = pneg %p46
        $region26: #{gpn_wo_b_forward.1} parent=23 // pred_check_branch
          %235 = sbr.rel (%p233) target = $region28
        $region27: #{gpn_wo_b_forward.1} parent=23 // pred_region
          %s236 = sand.u32 %s36, 1
          %s237 = scalar_lea.sflag [#allocation3], %s236
          %s238 = sand.u32 %s36, 1
          %s239 = smul.addr %s238, 128
          %s240 = scalar_lea.vmem [#allocation2], %s239
          %s241 = smul.u32 16, %s26
          %s243 = ssub.s32 2048, 2048
          %244 = vsyncadd %s237, %s243
          %s245 = smul.addr %s241, 128
          %s246 = scalar_lea.hbm %s0, %s245
          %s247 = sshll.u32 %s240, 4
          %s248 = int_to_ptr.vmem [resolvable:$true] %s247
          %253 = dma.hbm_to_vmem [thread:$0]  %s246, 2048, %s248, %s237, 128, 128, 8
        $region28: #{gpn_wo_b_forward.1} parent=23 // pred_fallthru
          _
        // Predicated region
        $region29: #{gpn_wo_b_forward.1} parent=23 // pred_check
          %p254 = pneg %p72
        $region30: #{gpn_wo_b_forward.1} parent=23 // pred_check_branch
          %256 = sbr.rel (%p254) target = $region32
        $region31: #{gpn_wo_b_forward.1} parent=23 // pred_region
          %s257 = sand.u32 %s26, 1
          %s258 = scalar_lea.sflag [#allocation6], %s257
          %s259 = sand.u32 %s62, 1
          %s260 = smul.addr %s259, 128
          %s261 = scalar_lea.vmem [#allocation5], %s260
          %s262 = smul.u32 16, %s26
          %s264 = ssub.s32 2048, 2048
          %265 = vsyncadd %s258, %s264
          %s266 = smul.addr %s262, 128
          %s267 = scalar_lea.hbm %s1, %s266
          %s268 = sshll.u32 %s261, 4
          %s269 = int_to_ptr.vmem [resolvable:$true] %s268
          %274 = dma.hbm_to_vmem [thread:$0]  %s267, 2048, %s269, %s258, 128, 128, 8
        $region32: #{gpn_wo_b_forward.1} parent=23 // pred_fallthru
          _
        // Predicated region
        $region33: #{gpn_wo_b_forward.1} parent=23 // pred_check
          %p275 = pneg %p98
        $region34: #{gpn_wo_b_forward.1} parent=23 // pred_check_branch
          %277 = sbr.rel (%p275) target = $region36
        $region35: #{gpn_wo_b_forward.1} parent=23 // pred_region
          %s278 = sand.u32 %s26, 1
          %s279 = scalar_lea.sflag [#allocation6], %s278
          %s280 = sand.u32 %s88, 1
          %s281 = smul.addr %s280, 128
          %s282 = scalar_lea.vmem [#allocation7], %s281
          %s283 = smul.u32 16, %s26
          %s285 = ssub.s32 2048, 2048
          %286 = vsyncadd %s279, %s285
          %s287 = smul.addr %s283, 128
          %s288 = scalar_lea.hbm %s2, %s287
          %s289 = sshll.u32 %s282, 4
          %s290 = int_to_ptr.vmem [resolvable:$true] %s289
          %295 = dma.hbm_to_vmem [thread:$0]  %s288, 2048, %s290, %s279, 128, 128, 8
        $region36: #{gpn_wo_b_forward.1} parent=23 // pred_fallthru
          _
      $region24: #{gpn_wo_b_forward.1} parent=5 // pred_fallthru
        _
      %p296 = scmp.le.s32.totalorder 1, %s26
      %p297 = scmp.lt.s32.totalorder %s26, 3
      %p298 = pnand %p296, %p297
      %p299 = pneg %p298
      // Predicated region
      $region37: #{gpn_wo_b_forward.1} parent=5 // pred_check
        _
      $region38: #{gpn_wo_b_forward.1} parent=5 // pred_check_branch
        %301 = sbr.rel (%p298) target = $region40
      $region39: #{gpn_wo_b_forward.1} parent=5 // pred_region
        %s302 = ssub.s32 %s26, 1
        %s303 = sand.u32 %s39, 1
        %s304 = scalar_lea.sflag [#allocation3], %s303
        %s305 = sand.u32 %s39, 1
        %s306 = smul.addr %s305, 128
        %s307 = scalar_lea.vmem [#allocation2], %s306
        // Predicated region
        $region41: #{gpn_wo_b_forward.1} parent=39 // pred_check
          %p308 = pneg %p52
        $region42: #{gpn_wo_b_forward.1} parent=39 // pred_check_branch
          %310 = sbr.rel (%p308) target = $region44
        $region43: #{gpn_wo_b_forward.1} parent=39 // pred_region
          %311 = dma.done %s304, 2048
        $region44: #{gpn_wo_b_forward.1} parent=39 // pred_fallthru
          _
        %s312 = sand.u32 %s31, 1
        %s313 = scalar_lea.sflag [#allocation6], %s312
        %s314 = sand.u32 %s65, 1
        %s315 = smul.addr %s314, 128
        %s316 = scalar_lea.vmem [#allocation5], %s315
        // Predicated region
        $region45: #{gpn_wo_b_forward.1} parent=39 // pred_check
          %p317 = pneg %p78
        $region46: #{gpn_wo_b_forward.1} parent=39 // pred_check_branch
          %319 = sbr.rel (%p317) target = $region48
        $region47: #{gpn_wo_b_forward.1} parent=39 // pred_region
          %320 = dma.done %s313, 2048
        $region48: #{gpn_wo_b_forward.1} parent=39 // pred_fallthru
          _
        %s321 = sand.u32 %s31, 1
        %s322 = scalar_lea.sflag [#allocation6], %s321
        %s323 = sand.u32 %s91, 1
        %s324 = smul.addr %s323, 128
        %s325 = scalar_lea.vmem [#allocation7], %s324
        // Predicated region
        $region49: #{gpn_wo_b_forward.1} parent=39 // pred_check
          %p326 = pneg %p104
        $region50: #{gpn_wo_b_forward.1} parent=39 // pred_check_branch
          %328 = sbr.rel (%p326) target = $region52
        $region51: #{gpn_wo_b_forward.1} parent=39 // pred_region
          %329 = dma.done %s322, 2048
        $region52: #{gpn_wo_b_forward.1} parent=39 // pred_fallthru
          _
        // Predicated region
        $region53: #{gpn_wo_b_forward.1} parent=39 // pred_check
          %p330 = pneg %p125
        $region54: #{gpn_wo_b_forward.1} parent=39 // pred_check_branch
          %332 = sbr.rel (%p330) target = $region56
        $region55: #{gpn_wo_b_forward.1} parent=39 // pred_region
          %333 = dma.done [#allocation9], 12288
        $region56: #{gpn_wo_b_forward.1} parent=39 // pred_fallthru
          _
        %s334 = sand.u32 %s39, 1
        %s335 = scalar_lea.sflag [#allocation3], %s334
        %s336 = sand.u32 %s39, 1
        %s337 = smul.addr %s336, 128
        %s338 = scalar_lea.vmem [#allocation2], %s337
        %p339 = pneg %p52
        %p340 = pneg %p49
        %s341 = sand.u32 %s31, 1
        %s342 = scalar_lea.sflag [#allocation6], %s341
        %s343 = sand.u32 %s65, 1
        %s344 = smul.addr %s343, 128
        %s345 = scalar_lea.vmem [#allocation5], %s344
        %p346 = pneg %p78
        %p347 = pneg %p75
        %s348 = sand.u32 %s31, 1
        %s349 = scalar_lea.sflag [#allocation6], %s348
        %s350 = sand.u32 %s91, 1
        %s351 = smul.addr %s350, 128
        %s352 = scalar_lea.vmem [#allocation7], %s351
        %p353 = pneg %p104
        %p354 = pneg %p101
        %p355 = pneg %p125
        %p356 = pneg %p122
        %p357 = pneg %p146
        %p358 = pneg %p143
        %p359 = pneg %p172
        %p360 = pneg %p169
        %s361 = sand.u32 %s159, 1
        %s362 = scalar_lea.sflag [#allocation4], %s361
        %s363 = sand.u32 %s159, 1
        %s364 = smul.addr %s363, 128
        %s365 = scalar_lea.vmem [#allocation10], %s364
        %p366 = pneg %p198
        %p367 = pneg %p195
        %s368 = sand.u32 %s185, 1
        %s369 = scalar_lea.sflag [#allocation12], %s368
        %s370 = sand.u32 %s185, 1
        %s371 = smul.addr %s370, 128
        %s372 = scalar_lea.vmem [#allocation11], %s371
        %s373 = smul.u32 16, %s31
        %s374 = smul.u32 16, %s31
        %s375 = smul.u32 16, %s31
        %s376 = smul.u32 16, %s31
        %s377 = smul.u32 16, %s31
        %v378 = vld [vmem:[%s307] sm:$0xff]
        %v379 = vld [vmem:[%s307 + $0x8] sm:$0xff]
        %v380 = vld [vmem:[%s307 + $0x10] sm:$0xff]
        %v381 = vld [vmem:[%s307 + $0x18] sm:$0xff]
        %v382 = vld [vmem:[%s307 + $0x20] sm:$0xff]
        %v383 = vld [vmem:[%s307 + $0x28] sm:$0xff]
        %v384 = vld [vmem:[%s307 + $0x30] sm:$0xff]
        %v385 = vld [vmem:[%s307 + $0x38] sm:$0xff]
        %v386 = vld [vmem:[%s307 + $0x40] sm:$0xff]
        %v387 = vld [vmem:[%s307 + $0x48] sm:$0xff]
        %v388 = vld [vmem:[%s307 + $0x50] sm:$0xff]
        %v389 = vld [vmem:[%s307 + $0x58] sm:$0xff]
        %v390 = vld [vmem:[%s307 + $0x60] sm:$0xff]
        %v391 = vld [vmem:[%s307 + $0x68] sm:$0xff]
        %v392 = vld [vmem:[%s307 + $0x70] sm:$0xff]
        %v393 = vld [vmem:[%s307 + $0x78] sm:$0xff]
        %v394 = vld [vmem:[%s316] sm:$0xff]
        %v395 = vld [vmem:[%s316 + $0x8] sm:$0xff]
        %v396 = vld [vmem:[%s316 + $0x10] sm:$0xff]
        %v397 = vld [vmem:[%s316 + $0x18] sm:$0xff]
        %v398 = vld [vmem:[%s316 + $0x20] sm:$0xff]
        %v399 = vld [vmem:[%s316 + $0x28] sm:$0xff]
        %v400 = vld [vmem:[%s316 + $0x30] sm:$0xff]
        %v401 = vld [vmem:[%s316 + $0x38] sm:$0xff]
        %v402 = vld [vmem:[%s316 + $0x40] sm:$0xff]
        %v403 = vld [vmem:[%s316 + $0x48] sm:$0xff]
        %v404 = vld [vmem:[%s316 + $0x50] sm:$0xff]
        %v405 = vld [vmem:[%s316 + $0x58] sm:$0xff]
        %v406 = vld [vmem:[%s316 + $0x60] sm:$0xff]
        %v407 = vld [vmem:[%s316 + $0x68] sm:$0xff]
        %v408 = vld [vmem:[%s316 + $0x70] sm:$0xff]
        %v409 = vld [vmem:[%s316 + $0x78] sm:$0xff]
        %v410 = vld [vmem:[#allocation8] sm:$0xff]
        %v411 = vld [vmem:[#allocation8 + $0x8] sm:$0xff]
        %v412 = vld [vmem:[#allocation8 + $0x10] sm:$0xff]
        %v413 = vld [vmem:[#allocation8 + $0x18] sm:$0xff]
        %v414 = vld [vmem:[#allocation8 + $0x20] sm:$0xff]
        %v415 = vld [vmem:[#allocation8 + $0x28] sm:$0xff]
        %v416 = vld [vmem:[#allocation8 + $0x30] sm:$0xff]
        %v417 = vld [vmem:[#allocation8 + $0x38] sm:$0xff]
        %v418 = vld [vmem:[#allocation8 + $0x40] sm:$0xff]
        %v419 = vld [vmem:[#allocation8 + $0x48] sm:$0xff]
        %v420 = vld [vmem:[#allocation8 + $0x50] sm:$0xff]
        %v421 = vld [vmem:[#allocation8 + $0x58] sm:$0xff]
        %v422 = vld [vmem:[#allocation8 + $0x60] sm:$0xff]
        %v423 = vld [vmem:[#allocation8 + $0x68] sm:$0xff]
        %v424 = vld [vmem:[#allocation8 + $0x70] sm:$0xff]
        %v425 = vld [vmem:[#allocation8 + $0x78] sm:$0xff]
        %v426 = vld [vmem:[#allocation8 + $0x80] sm:$0xff]
        %v427 = vld [vmem:[#allocation8 + $0x88] sm:$0xff]
        %v428 = vld [vmem:[#allocation8 + $0x90] sm:$0xff]
        %v429 = vld [vmem:[#allocation8 + $0x98] sm:$0xff]
        %v430 = vld [vmem:[#allocation8 + $0xa0] sm:$0xff]
        %v431 = vld [vmem:[#allocation8 + $0xa8] sm:$0xff]
        %v432 = vld [vmem:[#allocation8 + $0xb0] sm:$0xff]
        %v433 = vld [vmem:[#allocation8 + $0xb8] sm:$0xff]
        %v434 = vld [vmem:[#allocation8 + $0xc0] sm:$0xff]
        %v435 = vld [vmem:[#allocation8 + $0xc8] sm:$0xff]
        %v436 = vld [vmem:[#allocation8 + $0xd0] sm:$0xff]
        %v437 = vld [vmem:[#allocation8 + $0xd8] sm:$0xff]
        %v438 = vld [vmem:[#allocation8 + $0xe0] sm:$0xff]
        %v439 = vld [vmem:[#allocation8 + $0xe8] sm:$0xff]
        %v440 = vld [vmem:[#allocation8 + $0xf0] sm:$0xff]
        %v441 = vld [vmem:[#allocation8 + $0xf8] sm:$0xff]
        %v442 = vld [vmem:[#allocation8 + $0x100] sm:$0xff]
        %v443 = vld [vmem:[#allocation8 + $0x108] sm:$0xff]
        %v444 = vld [vmem:[#allocation8 + $0x110] sm:$0xff]
        %v445 = vld [vmem:[#allocation8 + $0x118] sm:$0xff]
        %v446 = vld [vmem:[#allocation8 + $0x120] sm:$0xff]
        %v447 = vld [vmem:[#allocation8 + $0x128] sm:$0xff]
        %v448 = vld [vmem:[#allocation8 + $0x130] sm:$0xff]
        %v449 = vld [vmem:[#allocation8 + $0x138] sm:$0xff]
        %v450 = vld [vmem:[#allocation8 + $0x140] sm:$0xff]
        %v451 = vld [vmem:[#allocation8 + $0x148] sm:$0xff]
        %v452 = vld [vmem:[#allocation8 + $0x150] sm:$0xff]
        %v453 = vld [vmem:[#allocation8 + $0x158] sm:$0xff]
        %v454 = vld [vmem:[#allocation8 + $0x160] sm:$0xff]
        %v455 = vld [vmem:[#allocation8 + $0x168] sm:$0xff]
        %v456 = vld [vmem:[#allocation8 + $0x170] sm:$0xff]
        %v457 = vld [vmem:[#allocation8 + $0x178] sm:$0xff]
        %v458 = vld [vmem:[#allocation8 + $0x180] sm:$0xff]
        %v459 = vld [vmem:[#allocation8 + $0x188] sm:$0xff]
        %v460 = vld [vmem:[#allocation8 + $0x190] sm:$0xff]
        %v461 = vld [vmem:[#allocation8 + $0x198] sm:$0xff]
        %v462 = vld [vmem:[#allocation8 + $0x1a0] sm:$0xff]
        %v463 = vld [vmem:[#allocation8 + $0x1a8] sm:$0xff]
        %v464 = vld [vmem:[#allocation8 + $0x1b0] sm:$0xff]
        %v465 = vld [vmem:[#allocation8 + $0x1b8] sm:$0xff]
        %v466 = vld [vmem:[#allocation8 + $0x1c0] sm:$0xff]
        %v467 = vld [vmem:[#allocation8 + $0x1c8] sm:$0xff]
        %v468 = vld [vmem:[#allocation8 + $0x1d0] sm:$0xff]
        %v469 = vld [vmem:[#allocation8 + $0x1d8] sm:$0xff]
        %v470 = vld [vmem:[#allocation8 + $0x1e0] sm:$0xff]
        %v471 = vld [vmem:[#allocation8 + $0x1e8] sm:$0xff]
        %v472 = vld [vmem:[#allocation8 + $0x1f0] sm:$0xff]
        %v473 = vld [vmem:[#allocation8 + $0x1f8] sm:$0xff]
        %v474 = vld [vmem:[#allocation8 + $0x200] sm:$0xff]
        %v475 = vld [vmem:[#allocation8 + $0x208] sm:$0xff]
        %v476 = vld [vmem:[#allocation8 + $0x210] sm:$0xff]
        %v477 = vld [vmem:[#allocation8 + $0x218] sm:$0xff]
        %v478 = vld [vmem:[#allocation8 + $0x220] sm:$0xff]
        %v479 = vld [vmem:[#allocation8 + $0x228] sm:$0xff]
        %v480 = vld [vmem:[#allocation8 + $0x230] sm:$0xff]
        %v481 = vld [vmem:[#allocation8 + $0x238] sm:$0xff]
        %v482 = vld [vmem:[#allocation8 + $0x240] sm:$0xff]
        %v483 = vld [vmem:[#allocation8 + $0x248] sm:$0xff]
        %v484 = vld [vmem:[#allocation8 + $0x250] sm:$0xff]
        %v485 = vld [vmem:[#allocation8 + $0x258] sm:$0xff]
        %v486 = vld [vmem:[#allocation8 + $0x260] sm:$0xff]
        %v487 = vld [vmem:[#allocation8 + $0x268] sm:$0xff]
        %v488 = vld [vmem:[#allocation8 + $0x270] sm:$0xff]
        %v489 = vld [vmem:[#allocation8 + $0x278] sm:$0xff]
        %v490 = vld [vmem:[#allocation8 + $0x280] sm:$0xff]
        %v491 = vld [vmem:[#allocation8 + $0x288] sm:$0xff]
        %v492 = vld [vmem:[#allocation8 + $0x290] sm:$0xff]
        %v493 = vld [vmem:[#allocation8 + $0x298] sm:$0xff]
        %v494 = vld [vmem:[#allocation8 + $0x2a0] sm:$0xff]
        %v495 = vld [vmem:[#allocation8 + $0x2a8] sm:$0xff]
        %v496 = vld [vmem:[#allocation8 + $0x2b0] sm:$0xff]
        %v497 = vld [vmem:[#allocation8 + $0x2b8] sm:$0xff]
        %v498 = vld [vmem:[#allocation8 + $0x2c0] sm:$0xff]
        %v499 = vld [vmem:[#allocation8 + $0x2c8] sm:$0xff]
        %v500 = vld [vmem:[#allocation8 + $0x2d0] sm:$0xff]
        %v501 = vld [vmem:[#allocation8 + $0x2d8] sm:$0xff]
        %v502 = vld [vmem:[#allocation8 + $0x2e0] sm:$0xff]
        %v503 = vld [vmem:[#allocation8 + $0x2e8] sm:$0xff]
        %v504 = vld [vmem:[#allocation8 + $0x2f0] sm:$0xff]
        %v505 = vld [vmem:[#allocation8 + $0x2f8] sm:$0xff]
        %v506 = vld [vmem:[%s4] sm:$0x7]
        %v508 = vlaneseq
        %v509 = vshrl.u32 %v508, 7
        %v510 = vsub.s32 0, %v509
        %v511 = vrot.slane %v506, %v510
        %v512 = vlaneseq
        %v513 = vshrl.u32 %v512, 7
        %v514 = vsub.s32 1, %v513
        %v515 = vrot.slane %v506, %v514
        %v516 = vlaneseq
        %v517 = vshrl.u32 %v516, 7
        %v518 = vsub.s32 2, %v517
        %v519 = vrot.slane %v506, %v518
        %523 = vmatprep.subr.mxu0 %v411
        %524 = vmatpush1.msra.mxu0 %v410
        %525 = vmatprep.subr.mxu0 %v414
        %526 = vmatpush1.msra.mxu0 %v413
        %527 = vmatprep.subr.mxu0 %v417
        %528 = vmatpush1.msra.mxu0 %v416
        %529 = vmatprep.subr.mxu0 %v420
        %530 = vmatpush1.msra.mxu0 %v419
        %531 = vmatprep.subr.mxu0 %v423
        %532 = vmatpush1.msra.mxu0 %v422
        %533 = vmatprep.subr.mxu0 %v426
        %534 = vmatpush1.msra.mxu0 %v425
        %535 = vmatprep.subr.mxu0 %v429
        %536 = vmatpush1.msra.mxu0 %v428
        %537 = vmatprep.subr.mxu0 %v432
        %538 = vmatpush1.msra.mxu0 %v431
        %539 = vmatprep.subr.mxu0 %v435
        %540 = vmatpush1.msra.mxu0 %v434
        %541 = vmatprep.subr.mxu0 %v438
        %542 = vmatpush1.msra.mxu0 %v437
        %543 = vmatprep.subr.mxu0 %v441
        %544 = vmatpush1.msra.mxu0 %v440
        %545 = vmatprep.subr.mxu0 %v444
        %546 = vmatpush1.msra.mxu0 %v443
        %547 = vmatprep.subr.mxu0 %v447
        %548 = vmatpush1.msra.mxu0 %v446
        %549 = vmatprep.subr.mxu0 %v450
        %550 = vmatpush1.msra.mxu0 %v449
        %551 = vmatprep.subr.mxu0 %v453
        %552 = vmatpush1.msra.mxu0 %v452
        %553 = vmatprep.subr.mxu0 %v456
        %554 = vmatpush1.msra.mxu0 %v455
        %555 = vmatprep.subr.mxu0 %v459
        %556 = vmatpush1.msra.mxu0 %v458
        %557 = vmatprep.subr.mxu0 %v462
        %558 = vmatpush1.msra.mxu0 %v461
        %559 = vmatprep.subr.mxu0 %v465
        %560 = vmatpush1.msra.mxu0 %v464
        %561 = vmatprep.subr.mxu0 %v468
        %562 = vmatpush1.msra.mxu0 %v467
        %563 = vmatprep.subr.mxu0 %v471
        %564 = vmatpush1.msra.mxu0 %v470
        %565 = vmatprep.subr.mxu0 %v474
        %566 = vmatpush1.msra.mxu0 %v473
        %567 = vmatprep.subr.mxu0 %v477
        %568 = vmatpush1.msra.mxu0 %v476
        %569 = vmatprep.subr.mxu0 %v480
        %570 = vmatpush1.msra.mxu0 %v479
        %571 = vmatprep.subr.mxu0 %v483
        %572 = vmatpush1.msra.mxu0 %v482
        %573 = vmatprep.subr.mxu0 %v486
        %574 = vmatpush1.msra.mxu0 %v485
        %575 = vmatprep.subr.mxu0 %v489
        %576 = vmatpush1.msra.mxu0 %v488
        %577 = vmatprep.subr.mxu0 %v492
        %578 = vmatpush1.msra.mxu0 %v491
        %579 = vmatprep.subr.mxu0 %v495
        %580 = vmatpush1.msra.mxu0 %v494
        %581 = vmatprep.subr.mxu0 %v498
        %582 = vmatpush1.msra.mxu0 %v497
        %583 = vmatprep.subr.mxu0 %v501
        %584 = vmatpush1.msra.mxu0 %v500
        %585 = vmatprep.subr.mxu0 %v504
        %586 = vmatpush1.msra.mxu0 %v503
        %587 = vmatprep.mubr.f32.mxu0 %v378
        %588 = vmatmul.mubr.f32.gmra.mrb[0].mxu0 %v394
        %v589 = vpop.f32.mrb[0].mxu0
        %v590 = vadd.f32 %v511, %v589
        %v591 = vpop.f32.mrb[0].mxu0
        %v592 = vadd.f32 %v515, %v591
        %593 = vmatprep.mubr.f32.mxu0 %v379
        %594 = vmatmul.mubr.f32.gmra.mrb[0].mxu0 %v395
        %v595 = vpop.f32.mrb[0].mxu0
        %v596 = vadd.f32 %v511, %v595
        %v597 = vpop.f32.mrb[0].mxu0
        %v598 = vadd.f32 %v515, %v597
        %599 = vmatprep.mubr.f32.mxu0 %v380
        %600 = vmatmul.mubr.f32.gmra.mrb[0].mxu0 %v396
        %v601 = vpop.f32.mrb[0].mxu0
        %v602 = vadd.f32 %v511, %v601
        %v603 = vpop.f32.mrb[0].mxu0
        %v604 = vadd.f32 %v515, %v603
        %605 = vmatprep.mubr.f32.mxu0 %v381
        %606 = vmatmul.mubr.f32.gmra.mrb[0].mxu0 %v397
        %v607 = vpop.f32.mrb[0].mxu0
        %v608 = vadd.f32 %v511, %v607
        %v609 = vpop.f32.mrb[0].mxu0
        %v610 = vadd.f32 %v515, %v609
        %611 = vmatprep.mubr.f32.mxu0 %v382
        %612 = vmatmul.mubr.f32.gmra.mrb[0].mxu0 %v398
        %v613 = vpop.f32.mrb[0].mxu0
        %v614 = vadd.f32 %v511, %v613
        %v615 = vpop.f32.mrb[0].mxu0
        %v616 = vadd.f32 %v515, %v615
        %617 = vmatprep.mubr.f32.mxu0 %v383
        %618 = vmatmul.mubr.f32.gmra.mrb[0].mxu0 %v399
        %v619 = vpop.f32.mrb[0].mxu0
        %v620 = vadd.f32 %v511, %v619
        %v621 = vpop.f32.mrb[0].mxu0
        %v622 = vadd.f32 %v515, %v621
        %623 = vmatprep.mubr.f32.mxu0 %v384
        %624 = vmatmul.mubr.f32.gmra.mrb[0].mxu0 %v400
        %v625 = vpop.f32.mrb[0].mxu0
        %v626 = vadd.f32 %v511, %v625
        %v627 = vpop.f32.mrb[0].mxu0
        %v628 = vadd.f32 %v515, %v627
        %629 = vmatprep.mubr.f32.mxu0 %v385
        %630 = vmatmul.mubr.f32.gmra.mrb[0].mxu0 %v401
        %v631 = vpop.f32.mrb[0].mxu0
        %v632 = vadd.f32 %v511, %v631
        %v633 = vpop.f32.mrb[0].mxu0
        %v634 = vadd.f32 %v515, %v633
        %635 = vmatprep.mubr.f32.mxu0 %v386
        %636 = vmatmul.mubr.f32.gmra.mrb[0].mxu0 %v402
        %v637 = vpop.f32.mrb[0].mxu0
        %v638 = vadd.f32 %v511, %v637
        %v639 = vpop.f32.mrb[0].mxu0
        %v640 = vadd.f32 %v515, %v639
        %641 = vmatprep.mubr.f32.mxu0 %v387
        %642 = vmatmul.mubr.f32.gmra.mrb[0].mxu0 %v403
        %v643 = vpop.f32.mrb[0].mxu0
        %v644 = vadd.f32 %v511, %v643
        %v645 = vpop.f32.mrb[0].mxu0
        %v646 = vadd.f32 %v515, %v645
        %647 = vmatprep.mubr.f32.mxu0 %v388
        %648 = vmatmul.mubr.f32.gmra.mrb[0].mxu0 %v404
        %v649 = vpop.f32.mrb[0].mxu0
        %v650 = vadd.f32 %v511, %v649
        %v651 = vpop.f32.mrb[0].mxu0
        %v652 = vadd.f32 %v515, %v651
        %653 = vmatprep.mubr.f32.mxu0 %v389
        %654 = vmatmul.mubr.f32.gmra.mrb[0].mxu0 %v405
        %v655 = vpop.f32.mrb[0].mxu0
        %v656 = vadd.f32 %v511, %v655
        %v657 = vpop.f32.mrb[0].mxu0
        %v658 = vadd.f32 %v515, %v657
        %659 = vmatprep.mubr.f32.mxu0 %v390
        %660 = vmatmul.mubr.f32.gmra.mrb[0].mxu0 %v406
        %v661 = vpop.f32.mrb[0].mxu0
        %v662 = vadd.f32 %v511, %v661
        %v663 = vpop.f32.mrb[0].mxu0
        %v664 = vadd.f32 %v515, %v663
        %665 = vmatprep.mubr.f32.mxu0 %v391
        %666 = vmatmul.mubr.f32.gmra.mrb[0].mxu0 %v407
        %v667 = vpop.f32.mrb[0].mxu0
        %v668 = vadd.f32 %v511, %v667
        %v669 = vpop.f32.mrb[0].mxu0
        %v670 = vadd.f32 %v515, %v669
        %671 = vmatprep.mubr.f32.mxu0 %v392
        %672 = vmatmul.mubr.f32.gmra.mrb[0].mxu0 %v408
        %v673 = vpop.f32.mrb[0].mxu0
        %v674 = vadd.f32 %v511, %v673
        %v675 = vpop.f32.mrb[0].mxu0
        %v676 = vadd.f32 %v515, %v675
        %677 = vmatprep.mubr.f32.mxu0 %v393
        %678 = vmatmul.mubr.f32.gmra.mrb[0].mxu0 %v409
        %v679 = vpop.f32.mrb[0].mxu0
        %v680 = vadd.f32 %v511, %v679
        %v681 = vpop.f32.mrb[0].mxu0
        %v682 = vadd.f32 %v515, %v681
        %683 = vdwg.mxu0
        %684 = vmatprep.subr.mxu0 0.0
        %685 = vmatpush1.msra.mxu0 %v412
        %686 = vmatprep.subr.mxu0 0.0
        %687 = vmatpush1.msra.mxu0 %v415
        %688 = vmatprep.subr.mxu0 0.0
        %689 = vmatpush1.msra.mxu0 %v418
        %690 = vmatprep.subr.mxu0 0.0
        %691 = vmatpush1.msra.mxu0 %v421
        %692 = vmatprep.subr.mxu0 0.0
        %693 = vmatpush1.msra.mxu0 %v424
        %694 = vmatprep.subr.mxu0 0.0
        %695 = vmatpush1.msra.mxu0 %v427
        %696 = vmatprep.subr.mxu0 0.0
        %697 = vmatpush1.msra.mxu0 %v430
        %698 = vmatprep.subr.mxu0 0.0
        %699 = vmatpush1.msra.mxu0 %v433
        %700 = vmatprep.subr.mxu0 0.0
        %701 = vmatpush1.msra.mxu0 %v436
        %702 = vmatprep.subr.mxu0 0.0
        %703 = vmatpush1.msra.mxu0 %v439
        %704 = vmatprep.subr.mxu0 0.0
        %705 = vmatpush1.msra.mxu0 %v442
        %706 = vmatprep.subr.mxu0 0.0
        %707 = vmatpush1.msra.mxu0 %v445
        %708 = vmatprep.subr.mxu0 0.0
        %709 = vmatpush1.msra.mxu0 %v448
        %710 = vmatprep.subr.mxu0 0.0
        %711 = vmatpush1.msra.mxu0 %v451
        %712 = vmatprep.subr.mxu0 0.0
        %713 = vmatpush1.msra.mxu0 %v454
        %714 = vmatprep.subr.mxu0 0.0
        %715 = vmatpush1.msra.mxu0 %v457
        %716 = vmatprep.subr.mxu0 0.0
        %717 = vmatpush1.msra.mxu0 %v460
        %718 = vmatprep.subr.mxu0 0.0
        %719 = vmatpush1.msra.mxu0 %v463
        %720 = vmatprep.subr.mxu0 0.0
        %721 = vmatpush1.msra.mxu0 %v466
        %722 = vmatprep.subr.mxu0 0.0
        %723 = vmatpush1.msra.mxu0 %v469
        %724 = vmatprep.subr.mxu0 0.0
        %725 = vmatpush1.msra.mxu0 %v472
        %726 = vmatprep.subr.mxu0 0.0
        %727 = vmatpush1.msra.mxu0 %v475
        %728 = vmatprep.subr.mxu0 0.0
        %729 = vmatpush1.msra.mxu0 %v478
        %730 = vmatprep.subr.mxu0 0.0
        %731 = vmatpush1.msra.mxu0 %v481
        %732 = vmatprep.subr.mxu0 0.0
        %733 = vmatpush1.msra.mxu0 %v484
        %734 = vmatprep.subr.mxu0 0.0
        %735 = vmatpush1.msra.mxu0 %v487
        %736 = vmatprep.subr.mxu0 0.0
        %737 = vmatpush1.msra.mxu0 %v490
        %738 = vmatprep.subr.mxu0 0.0
        %739 = vmatpush1.msra.mxu0 %v493
        %740 = vmatprep.subr.mxu0 0.0
        %741 = vmatpush1.msra.mxu0 %v496
        %742 = vmatprep.subr.mxu0 0.0
        %743 = vmatpush1.msra.mxu0 %v499
        %744 = vmatprep.subr.mxu0 0.0
        %745 = vmatpush1.msra.mxu0 %v502
        %746 = vmatprep.subr.mxu0 0.0
        %747 = vmatpush1.msra.mxu0 %v505
        %748 = vmatprep.mubr.f32.mxu0 %v378
        %749 = vmatmul.mubr.f32.gmra.mrb[0].mxu0 %v394
        %v750 = vpop.f32.mrb[0].mxu0
        %v751 = vadd.f32 %v519, %v750
        %v752 = vpop.f32.mrb[0].mxu0
        %753 = vmatprep.mubr.f32.mxu0 %v379
        %754 = vmatmul.mubr.f32.gmra.mrb[0].mxu0 %v395
        %v755 = vpop.f32.mrb[0].mxu0
        %v756 = vadd.f32 %v519, %v755
        %v757 = vpop.f32.mrb[0].mxu0
        %758 = vmatprep.mubr.f32.mxu0 %v380
        %759 = vmatmul.mubr.f32.gmra.mrb[0].mxu0 %v396
        %v760 = vpop.f32.mrb[0].mxu0
        %v761 = vadd.f32 %v519, %v760
        %v762 = vpop.f32.mrb[0].mxu0
        %763 = vmatprep.mubr.f32.mxu0 %v381
        %764 = vmatmul.mubr.f32.gmra.mrb[0].mxu0 %v397
        %v765 = vpop.f32.mrb[0].mxu0
        %v766 = vadd.f32 %v519, %v765
        %v767 = vpop.f32.mrb[0].mxu0
        %768 = vmatprep.mubr.f32.mxu0 %v382
        %769 = vmatmul.mubr.f32.gmra.mrb[0].mxu0 %v398
        %v770 = vpop.f32.mrb[0].mxu0
        %v771 = vadd.f32 %v519, %v770
        %v772 = vpop.f32.mrb[0].mxu0
        %773 = vmatprep.mubr.f32.mxu0 %v383
        %774 = vmatmul.mubr.f32.gmra.mrb[0].mxu0 %v399
        %v775 = vpop.f32.mrb[0].mxu0
        %v776 = vadd.f32 %v519, %v775
        %v777 = vpop.f32.mrb[0].mxu0
        %778 = vmatprep.mubr.f32.mxu0 %v384
        %779 = vmatmul.mubr.f32.gmra.mrb[0].mxu0 %v400
        %v780 = vpop.f32.mrb[0].mxu0
        %v781 = vadd.f32 %v519, %v780
        %v782 = vpop.f32.mrb[0].mxu0
        %783 = vmatprep.mubr.f32.mxu0 %v385
        %784 = vmatmul.mubr.f32.gmra.mrb[0].mxu0 %v401
        %v785 = vpop.f32.mrb[0].mxu0
        %v786 = vadd.f32 %v519, %v785
        %v787 = vpop.f32.mrb[0].mxu0
        %788 = vmatprep.mubr.f32.mxu0 %v386
        %789 = vmatmul.mubr.f32.gmra.mrb[0].mxu0 %v402
        %v790 = vpop.f32.mrb[0].mxu0
        %v791 = vadd.f32 %v519, %v790
        %v792 = vpop.f32.mrb[0].mxu0
        %793 = vmatprep.mubr.f32.mxu0 %v387
        %794 = vmatmul.mubr.f32.gmra.mrb[0].mxu0 %v403
        %v795 = vpop.f32.mrb[0].mxu0
        %v796 = vadd.f32 %v519, %v795
        %v797 = vpop.f32.mrb[0].mxu0
        %798 = vmatprep.mubr.f32.mxu0 %v388
        %799 = vmatmul.mubr.f32.gmra.mrb[0].mxu0 %v404
        %v800 = vpop.f32.mrb[0].mxu0
        %v801 = vadd.f32 %v519, %v800
        %v802 = vpop.f32.mrb[0].mxu0
        %803 = vmatprep.mubr.f32.mxu0 %v389
        %804 = vmatmul.mubr.f32.gmra.mrb[0].mxu0 %v405
        %v805 = vpop.f32.mrb[0].mxu0
        %v806 = vadd.f32 %v519, %v805
        %v807 = vpop.f32.mrb[0].mxu0
        %808 = vmatprep.mubr.f32.mxu0 %v390
        %809 = vmatmul.mubr.f32.gmra.mrb[0].mxu0 %v406
        %v810 = vpop.f32.mrb[0].mxu0
        %v811 = vadd.f32 %v519, %v810
        %v812 = vpop.f32.mrb[0].mxu0
        %813 = vmatprep.mubr.f32.mxu0 %v391
        %814 = vmatmul.mubr.f32.gmra.mrb[0].mxu0 %v407
        %v815 = vpop.f32.mrb[0].mxu0
        %v816 = vadd.f32 %v519, %v815
        %v817 = vpop.f32.mrb[0].mxu0
        %818 = vmatprep.mubr.f32.mxu0 %v392
        %819 = vmatmul.mubr.f32.gmra.mrb[0].mxu0 %v408
        %v820 = vpop.f32.mrb[0].mxu0
        %v821 = vadd.f32 %v519, %v820
        %v822 = vpop.f32.mrb[0].mxu0
        %823 = vmatprep.mubr.f32.mxu0 %v393
        %824 = vmatmul.mubr.f32.gmra.mrb[0].mxu0 %v409
        %v825 = vpop.f32.mrb[0].mxu0
        %v826 = vadd.f32 %v519, %v825
        %v827 = vpop.f32.mrb[0].mxu0
        %828 = vdwg.mxu0
        %v829 = vxor.u32 %v590, 2147483648
        %v830 = vxor.u32 %v596, 2147483648
        %v831 = vxor.u32 %v602, 2147483648
        %v832 = vxor.u32 %v608, 2147483648
        %v833 = vxor.u32 %v614, 2147483648
        %v834 = vxor.u32 %v620, 2147483648
        %v835 = vxor.u32 %v626, 2147483648
        %v836 = vxor.u32 %v632, 2147483648
        %v837 = vxor.u32 %v638, 2147483648
        %v838 = vxor.u32 %v644, 2147483648
        %v839 = vxor.u32 %v650, 2147483648
        %v840 = vxor.u32 %v656, 2147483648
        %v841 = vxor.u32 %v662, 2147483648
        %v842 = vxor.u32 %v668, 2147483648
        %v843 = vxor.u32 %v674, 2147483648
        %v844 = vxor.u32 %v680, 2147483648
        %v845 = vmul.f32 %v829, 1.442695
        %v846 = vpow.pop %v845
        %v847 = vmul.f32 %v830, 1.442695
        %v848 = vpow.pop %v847
        %v849 = vmul.f32 %v831, 1.442695
        %v850 = vpow.pop %v849
        %v851 = vmul.f32 %v832, 1.442695
        %v852 = vpow.pop %v851
        %v853 = vmul.f32 %v833, 1.442695
        %v854 = vpow.pop %v853
        %v855 = vmul.f32 %v834, 1.442695
        %v856 = vpow.pop %v855
        %v857 = vmul.f32 %v835, 1.442695
        %v858 = vpow.pop %v857
        %v859 = vmul.f32 %v836, 1.442695
        %v860 = vpow.pop %v859
        %v861 = vmul.f32 %v837, 1.442695
        %v862 = vpow.pop %v861
        %v863 = vmul.f32 %v838, 1.442695
        %v864 = vpow.pop %v863
        %v865 = vmul.f32 %v839, 1.442695
        %v866 = vpow.pop %v865
        %v867 = vmul.f32 %v840, 1.442695
        %v868 = vpow.pop %v867
        %v869 = vmul.f32 %v841, 1.442695
        %v870 = vpow.pop %v869
        %v871 = vmul.f32 %v842, 1.442695
        %v872 = vpow.pop %v871
        %v873 = vmul.f32 %v843, 1.442695
        %v874 = vpow.pop %v873
        %v875 = vmul.f32 %v844, 1.442695
        %v876 = vpow.pop %v875
        %v877 = vadd.f32 %v846, 1.0
        %v878 = vadd.f32 %v848, 1.0
        %v879 = vadd.f32 %v850, 1.0
        %v880 = vadd.f32 %v852, 1.0
        %v881 = vadd.f32 %v854, 1.0
        %v882 = vadd.f32 %v856, 1.0
        %v883 = vadd.f32 %v858, 1.0
        %v884 = vadd.f32 %v860, 1.0
        %v885 = vadd.f32 %v862, 1.0
        %v886 = vadd.f32 %v864, 1.0
        %v887 = vadd.f32 %v866, 1.0
        %v888 = vadd.f32 %v868, 1.0
        %v889 = vadd.f32 %v870, 1.0
        %v890 = vadd.f32 %v872, 1.0
        %v891 = vadd.f32 %v874, 1.0
        %v892 = vadd.f32 %v876, 1.0
        %v893 = vrcp.pop %v877
        %v894 = vmul.f32 1.0, %v893
        %v895 = vrcp.pop %v878
        %v896 = vmul.f32 1.0, %v895
        %v897 = vrcp.pop %v879
        %v898 = vmul.f32 1.0, %v897
        %v899 = vrcp.pop %v880
        %v900 = vmul.f32 1.0, %v899
        %v901 = vrcp.pop %v881
        %v902 = vmul.f32 1.0, %v901
        %v903 = vrcp.pop %v882
        %v904 = vmul.f32 1.0, %v903
        %v905 = vrcp.pop %v883
        %v906 = vmul.f32 1.0, %v905
        %v907 = vrcp.pop %v884
        %v908 = vmul.f32 1.0, %v907
        %v909 = vrcp.pop %v885
        %v910 = vmul.f32 1.0, %v909
        %v911 = vrcp.pop %v886
        %v912 = vmul.f32 1.0, %v911
        %v913 = vrcp.pop %v887
        %v914 = vmul.f32 1.0, %v913
        %v915 = vrcp.pop %v888
        %v916 = vmul.f32 1.0, %v915
        %v917 = vrcp.pop %v889
        %v918 = vmul.f32 1.0, %v917
        %v919 = vrcp.pop %v890
        %v920 = vmul.f32 1.0, %v919
        %v921 = vrcp.pop %v891
        %v922 = vmul.f32 1.0, %v921
        %v923 = vrcp.pop %v892
        %v924 = vmul.f32 1.0, %v923
        %v925 = vxor.u32 %v592, 2147483648
        %v926 = vxor.u32 %v598, 2147483648
        %v927 = vxor.u32 %v604, 2147483648
        %v928 = vxor.u32 %v610, 2147483648
        %v929 = vxor.u32 %v616, 2147483648
        %v930 = vxor.u32 %v622, 2147483648
        %v931 = vxor.u32 %v628, 2147483648
        %v932 = vxor.u32 %v634, 2147483648
        %v933 = vxor.u32 %v640, 2147483648
        %v934 = vxor.u32 %v646, 2147483648
        %v935 = vxor.u32 %v652, 2147483648
        %v936 = vxor.u32 %v658, 2147483648
        %v937 = vxor.u32 %v664, 2147483648
        %v938 = vxor.u32 %v670, 2147483648
        %v939 = vxor.u32 %v676, 2147483648
        %v940 = vxor.u32 %v682, 2147483648
        %v941 = vmul.f32 %v925, 1.442695
        %v942 = vpow.pop %v941
        %v943 = vmul.f32 %v926, 1.442695
        %v944 = vpow.pop %v943
        %v945 = vmul.f32 %v927, 1.442695
        %v946 = vpow.pop %v945
        %v947 = vmul.f32 %v928, 1.442695
        %v948 = vpow.pop %v947
        %v949 = vmul.f32 %v929, 1.442695
        %v950 = vpow.pop %v949
        %v951 = vmul.f32 %v930, 1.442695
        %v952 = vpow.pop %v951
        %v953 = vmul.f32 %v931, 1.442695
        %v954 = vpow.pop %v953
        %v955 = vmul.f32 %v932, 1.442695
        %v956 = vpow.pop %v955
        %v957 = vmul.f32 %v933, 1.442695
        %v958 = vpow.pop %v957
        %v959 = vmul.f32 %v934, 1.442695
        %v960 = vpow.pop %v959
        %v961 = vmul.f32 %v935, 1.442695
        %v962 = vpow.pop %v961
        %v963 = vmul.f32 %v936, 1.442695
        %v964 = vpow.pop %v963
        %v965 = vmul.f32 %v937, 1.442695
        %v966 = vpow.pop %v965
        %v967 = vmul.f32 %v938, 1.442695
        %v968 = vpow.pop %v967
        %v969 = vmul.f32 %v939, 1.442695
        %v970 = vpow.pop %v969
        %v971 = vmul.f32 %v940, 1.442695
        %v972 = vpow.pop %v971
        %v973 = vadd.f32 %v942, 1.0
        %v974 = vadd.f32 %v944, 1.0
        %v975 = vadd.f32 %v946, 1.0
        %v976 = vadd.f32 %v948, 1.0
        %v977 = vadd.f32 %v950, 1.0
        %v978 = vadd.f32 %v952, 1.0
        %v979 = vadd.f32 %v954, 1.0
        %v980 = vadd.f32 %v956, 1.0
        %v981 = vadd.f32 %v958, 1.0
        %v982 = vadd.f32 %v960, 1.0
        %v983 = vadd.f32 %v962, 1.0
        %v984 = vadd.f32 %v964, 1.0
        %v985 = vadd.f32 %v966, 1.0
        %v986 = vadd.f32 %v968, 1.0
        %v987 = vadd.f32 %v970, 1.0
        %v988 = vadd.f32 %v972, 1.0
        %v989 = vrcp.pop %v973
        %v990 = vmul.f32 1.0, %v989
        %v991 = vrcp.pop %v974
        %v992 = vmul.f32 1.0, %v991
        %v993 = vrcp.pop %v975
        %v994 = vmul.f32 1.0, %v993
        %v995 = vrcp.pop %v976
        %v996 = vmul.f32 1.0, %v995
        %v997 = vrcp.pop %v977
        %v998 = vmul.f32 1.0, %v997
        %v999 = vrcp.pop %v978
        %v1000 = vmul.f32 1.0, %v999
        %v1001 = vrcp.pop %v979
        %v1002 = vmul.f32 1.0, %v1001
        %v1003 = vrcp.pop %v980
        %v1004 = vmul.f32 1.0, %v1003
        %v1005 = vrcp.pop %v981
        %v1006 = vmul.f32 1.0, %v1005
        %v1007 = vrcp.pop %v982
        %v1008 = vmul.f32 1.0, %v1007
        %v1009 = vrcp.pop %v983
        %v1010 = vmul.f32 1.0, %v1009
        %v1011 = vrcp.pop %v984
        %v1012 = vmul.f32 1.0, %v1011
        %v1013 = vrcp.pop %v985
        %v1014 = vmul.f32 1.0, %v1013
        %v1015 = vrcp.pop %v986
        %v1016 = vmul.f32 1.0, %v1015
        %v1017 = vrcp.pop %v987
        %v1018 = vmul.f32 1.0, %v1017
        %v1019 = vrcp.pop %v988
        %v1020 = vmul.f32 1.0, %v1019
        %v1021 = vxor.u32 %v751, 2147483648
        %v1022 = vxor.u32 %v756, 2147483648
        %v1023 = vxor.u32 %v761, 2147483648
        %v1024 = vxor.u32 %v766, 2147483648
        %v1025 = vxor.u32 %v771, 2147483648
        %v1026 = vxor.u32 %v776, 2147483648
        %v1027 = vxor.u32 %v781, 2147483648
        %v1028 = vxor.u32 %v786, 2147483648
        %v1029 = vxor.u32 %v791, 2147483648
        %v1030 = vxor.u32 %v796, 2147483648
        %v1031 = vxor.u32 %v801, 2147483648
        %v1032 = vxor.u32 %v806, 2147483648
        %v1033 = vxor.u32 %v811, 2147483648
        %v1034 = vxor.u32 %v816, 2147483648
        %v1035 = vxor.u32 %v821, 2147483648
        %v1036 = vxor.u32 %v826, 2147483648
        %v1037 = vmul.f32 %v1021, 1.442695
        %v1038 = vpow.pop %v1037
        %v1039 = vmul.f32 %v1022, 1.442695
        %v1040 = vpow.pop %v1039
        %v1041 = vmul.f32 %v1023, 1.442695
        %v1042 = vpow.pop %v1041
        %v1043 = vmul.f32 %v1024, 1.442695
        %v1044 = vpow.pop %v1043
        %v1045 = vmul.f32 %v1025, 1.442695
        %v1046 = vpow.pop %v1045
        %v1047 = vmul.f32 %v1026, 1.442695
        %v1048 = vpow.pop %v1047
        %v1049 = vmul.f32 %v1027, 1.442695
        %v1050 = vpow.pop %v1049
        %v1051 = vmul.f32 %v1028, 1.442695
        %v1052 = vpow.pop %v1051
        %v1053 = vmul.f32 %v1029, 1.442695
        %v1054 = vpow.pop %v1053
        %v1055 = vmul.f32 %v1030, 1.442695
        %v1056 = vpow.pop %v1055
        %v1057 = vmul.f32 %v1031, 1.442695
        %v1058 = vpow.pop %v1057
        %v1059 = vmul.f32 %v1032, 1.442695
        %v1060 = vpow.pop %v1059
        %v1061 = vmul.f32 %v1033, 1.442695
        %v1062 = vpow.pop %v1061
        %v1063 = vmul.f32 %v1034, 1.442695
        %v1064 = vpow.pop %v1063
        %v1065 = vmul.f32 %v1035, 1.442695
        %v1066 = vpow.pop %v1065
        %v1067 = vmul.f32 %v1036, 1.442695
        %v1068 = vpow.pop %v1067
        %v1069 = vadd.f32 %v1038, 1.0
        %v1070 = vadd.f32 %v1040, 1.0
        %v1071 = vadd.f32 %v1042, 1.0
        %v1072 = vadd.f32 %v1044, 1.0
        %v1073 = vadd.f32 %v1046, 1.0
        %v1074 = vadd.f32 %v1048, 1.0
        %v1075 = vadd.f32 %v1050, 1.0
        %v1076 = vadd.f32 %v1052, 1.0
        %v1077 = vadd.f32 %v1054, 1.0
        %v1078 = vadd.f32 %v1056, 1.0
        %v1079 = vadd.f32 %v1058, 1.0
        %v1080 = vadd.f32 %v1060, 1.0
        %v1081 = vadd.f32 %v1062, 1.0
        %v1082 = vadd.f32 %v1064, 1.0
        %v1083 = vadd.f32 %v1066, 1.0
        %v1084 = vadd.f32 %v1068, 1.0
        %v1085 = vrcp.pop %v1069
        %v1086 = vmul.f32 1.0, %v1085
        %v1087 = vrcp.pop %v1070
        %v1088 = vmul.f32 1.0, %v1087
        %v1089 = vrcp.pop %v1071
        %v1090 = vmul.f32 1.0, %v1089
        %v1091 = vrcp.pop %v1072
        %v1092 = vmul.f32 1.0, %v1091
        %v1093 = vrcp.pop %v1073
        %v1094 = vmul.f32 1.0, %v1093
        %v1095 = vrcp.pop %v1074
        %v1096 = vmul.f32 1.0, %v1095
        %v1097 = vrcp.pop %v1075
        %v1098 = vmul.f32 1.0, %v1097
        %v1099 = vrcp.pop %v1076
        %v1100 = vmul.f32 1.0, %v1099
        %v1101 = vrcp.pop %v1077
        %v1102 = vmul.f32 1.0, %v1101
        %v1103 = vrcp.pop %v1078
        %v1104 = vmul.f32 1.0, %v1103
        %v1105 = vrcp.pop %v1079
        %v1106 = vmul.f32 1.0, %v1105
        %v1107 = vrcp.pop %v1080
        %v1108 = vmul.f32 1.0, %v1107
        %v1109 = vrcp.pop %v1081
        %v1110 = vmul.f32 1.0, %v1109
        %v1111 = vrcp.pop %v1082
        %v1112 = vmul.f32 1.0, %v1111
        %v1113 = vrcp.pop %v1083
        %v1114 = vmul.f32 1.0, %v1113
        %v1115 = vrcp.pop %v1084
        %v1116 = vmul.f32 1.0, %v1115
        %v1117 = vmul.f32 %v894, %v394
        %v1118 = vmul.f32 %v896, %v395
        %v1119 = vmul.f32 %v898, %v396
        %v1120 = vmul.f32 %v900, %v397
        %v1121 = vmul.f32 %v902, %v398
        %v1122 = vmul.f32 %v904, %v399
        %v1123 = vmul.f32 %v906, %v400
        %v1124 = vmul.f32 %v908, %v401
        %v1125 = vmul.f32 %v910, %v402
        %v1126 = vmul.f32 %v912, %v403
        %v1127 = vmul.f32 %v914, %v404
        %v1128 = vmul.f32 %v916, %v405
        %v1129 = vmul.f32 %v918, %v406
        %v1130 = vmul.f32 %v920, %v407
        %v1131 = vmul.f32 %v922, %v408
        %v1132 = vmul.f32 %v924, %v409
        %v1133 = vmul.f32 %v990, %v378
        %v1134 = vmul.f32 %v992, %v379
        %v1135 = vmul.f32 %v994, %v380
        %v1136 = vmul.f32 %v996, %v381
        %v1137 = vmul.f32 %v998, %v382
        %v1138 = vmul.f32 %v1000, %v383
        %v1139 = vmul.f32 %v1002, %v384
        %v1140 = vmul.f32 %v1004, %v385
        %v1141 = vmul.f32 %v1006, %v386
        %v1142 = vmul.f32 %v1008, %v387
        %v1143 = vmul.f32 %v1010, %v388
        %v1144 = vmul.f32 %v1012, %v389
        %v1145 = vmul.f32 %v1014, %v390
        %v1146 = vmul.f32 %v1016, %v391
        %v1147 = vmul.f32 %v1018, %v392
        %v1148 = vmul.f32 %v1020, %v393
        %v1149 = vadd.f32 %v1117, %v1133
        %v1150 = vadd.f32 %v1118, %v1134
        %v1151 = vadd.f32 %v1119, %v1135
        %v1152 = vadd.f32 %v1120, %v1136
        %v1153 = vadd.f32 %v1121, %v1137
        %v1154 = vadd.f32 %v1122, %v1138
        %v1155 = vadd.f32 %v1123, %v1139
        %v1156 = vadd.f32 %v1124, %v1140
        %v1157 = vadd.f32 %v1125, %v1141
        %v1158 = vadd.f32 %v1126, %v1142
        %v1159 = vadd.f32 %v1127, %v1143
        %v1160 = vadd.f32 %v1128, %v1144
        %v1161 = vadd.f32 %v1129, %v1145
        %v1162 = vadd.f32 %v1130, %v1146
        %v1163 = vadd.f32 %v1131, %v1147
        %v1164 = vadd.f32 %v1132, %v1148
        %vm1165 = vcmp.ge.f32.partialorder %v1149, %v1086
        %vm1166 = vcmp.ge.f32.partialorder %v1150, %v1088
        %vm1167 = vcmp.ge.f32.partialorder %v1151, %v1090
        %vm1168 = vcmp.ge.f32.partialorder %v1152, %v1092
        %vm1169 = vcmp.ge.f32.partialorder %v1153, %v1094
        %vm1170 = vcmp.ge.f32.partialorder %v1154, %v1096
        %vm1171 = vcmp.ge.f32.partialorder %v1155, %v1098
        %vm1172 = vcmp.ge.f32.partialorder %v1156, %v1100
        %vm1173 = vcmp.ge.f32.partialorder %v1157, %v1102
        %vm1174 = vcmp.ge.f32.partialorder %v1158, %v1104
        %vm1175 = vcmp.ge.f32.partialorder %v1159, %v1106
        %vm1176 = vcmp.ge.f32.partialorder %v1160, %v1108
        %vm1177 = vcmp.ge.f32.partialorder %v1161, %v1110
        %vm1178 = vcmp.ge.f32.partialorder %v1162, %v1112
        %vm1179 = vcmp.ge.f32.partialorder %v1163, %v1114
        %vm1180 = vcmp.ge.f32.partialorder %v1164, %v1116
        %v1181 = vsel %vm1165, 1, 0
        %v1182 = vsel %vm1166, 1, 0
        %v1183 = vsel %vm1167, 1, 0
        %v1184 = vsel %vm1168, 1, 0
        %v1185 = vsel %vm1169, 1, 0
        %v1186 = vsel %vm1170, 1, 0
        %v1187 = vsel %vm1171, 1, 0
        %v1188 = vsel %vm1172, 1, 0
        %v1189 = vsel %vm1173, 1, 0
        %v1190 = vsel %vm1174, 1, 0
        %v1191 = vsel %vm1175, 1, 0
        %v1192 = vsel %vm1176, 1, 0
        %v1193 = vsel %vm1177, 1, 0
        %v1194 = vsel %vm1178, 1, 0
        %v1195 = vsel %vm1179, 1, 0
        %v1196 = vsel %vm1180, 1, 0
        %v1197 = vcvt.s32.f32 %v1181
        %v1198 = vcvt.s32.f32 %v1182
        %v1199 = vcvt.s32.f32 %v1183
        %v1200 = vcvt.s32.f32 %v1184
        %v1201 = vcvt.s32.f32 %v1185
        %v1202 = vcvt.s32.f32 %v1186
        %v1203 = vcvt.s32.f32 %v1187
        %v1204 = vcvt.s32.f32 %v1188
        %v1205 = vcvt.s32.f32 %v1189
        %v1206 = vcvt.s32.f32 %v1190
        %v1207 = vcvt.s32.f32 %v1191
        %v1208 = vcvt.s32.f32 %v1192
        %v1209 = vcvt.s32.f32 %v1193
        %v1210 = vcvt.s32.f32 %v1194
        %v1211 = vcvt.s32.f32 %v1195
        %v1212 = vcvt.s32.f32 %v1196
        %v1213 = vld [vmem:[%s325] sm:$0xff]
        %v1214 = vld [vmem:[%s325 + $0x8] sm:$0xff]
        %v1215 = vld [vmem:[%s325 + $0x10] sm:$0xff]
        %v1216 = vld [vmem:[%s325 + $0x18] sm:$0xff]
        %v1217 = vld [vmem:[%s325 + $0x20] sm:$0xff]
        %v1218 = vld [vmem:[%s325 + $0x28] sm:$0xff]
        %v1219 = vld [vmem:[%s325 + $0x30] sm:$0xff]
        %v1220 = vld [vmem:[%s325 + $0x38] sm:$0xff]
        %v1221 = vld [vmem:[%s325 + $0x40] sm:$0xff]
        %v1222 = vld [vmem:[%s325 + $0x48] sm:$0xff]
        %v1223 = vld [vmem:[%s325 + $0x50] sm:$0xff]
        %v1224 = vld [vmem:[%s325 + $0x58] sm:$0xff]
        %v1225 = vld [vmem:[%s325 + $0x60] sm:$0xff]
        %v1226 = vld [vmem:[%s325 + $0x68] sm:$0xff]
        %v1227 = vld [vmem:[%s325 + $0x70] sm:$0xff]
        %v1228 = vld [vmem:[%s325 + $0x78] sm:$0xff]
        %v1229 = vsel %vm1165, %v1213, %v1149
        %v1230 = vsel %vm1166, %v1214, %v1150
        %v1231 = vsel %vm1167, %v1215, %v1151
        %v1232 = vsel %vm1168, %v1216, %v1152
        %v1233 = vsel %vm1169, %v1217, %v1153
        %v1234 = vsel %vm1170, %v1218, %v1154
        %v1235 = vsel %vm1171, %v1219, %v1155
        %v1236 = vsel %vm1172, %v1220, %v1156
        %v1237 = vsel %vm1173, %v1221, %v1157
        %v1238 = vsel %vm1174, %v1222, %v1158
        %v1239 = vsel %vm1175, %v1223, %v1159
        %v1240 = vsel %vm1176, %v1224, %v1160
        %v1241 = vsel %vm1177, %v1225, %v1161
        %v1242 = vsel %vm1178, %v1226, %v1162
        %v1243 = vsel %vm1179, %v1227, %v1163
        %v1244 = vsel %vm1180, %v1228, %v1164
        %1245 = vst [vmem:[%s365] sm:$0xff] %v1197
        %1246 = vst [vmem:[%s365 + $0x8] sm:$0xff] %v1198
        %1247 = vst [vmem:[%s365 + $0x10] sm:$0xff] %v1199
        %1248 = vst [vmem:[%s365 + $0x18] sm:$0xff] %v1200
        %1249 = vst [vmem:[%s365 + $0x20] sm:$0xff] %v1201
        %1250 = vst [vmem:[%s365 + $0x28] sm:$0xff] %v1202
        %1251 = vst [vmem:[%s365 + $0x30] sm:$0xff] %v1203
        %1252 = vst [vmem:[%s365 + $0x38] sm:$0xff] %v1204
        %1253 = vst [vmem:[%s365 + $0x40] sm:$0xff] %v1205
        %1254 = vst [vmem:[%s365 + $0x48] sm:$0xff] %v1206
        %1255 = vst [vmem:[%s365 + $0x50] sm:$0xff] %v1207
        %1256 = vst [vmem:[%s365 + $0x58] sm:$0xff] %v1208
        %1257 = vst [vmem:[%s365 + $0x60] sm:$0xff] %v1209
        %1258 = vst [vmem:[%s365 + $0x68] sm:$0xff] %v1210
        %1259 = vst [vmem:[%s365 + $0x70] sm:$0xff] %v1211
        %1260 = vst [vmem:[%s365 + $0x78] sm:$0xff] %v1212
        %1261 = vst [vmem:[%s372] sm:$0xff] %v1229
        %1262 = vst [vmem:[%s372 + $0x8] sm:$0xff] %v1230
        %1263 = vst [vmem:[%s372 + $0x10] sm:$0xff] %v1231
        %1264 = vst [vmem:[%s372 + $0x18] sm:$0xff] %v1232
        %1265 = vst [vmem:[%s372 + $0x20] sm:$0xff] %v1233
        %1266 = vst [vmem:[%s372 + $0x28] sm:$0xff] %v1234
        %1267 = vst [vmem:[%s372 + $0x30] sm:$0xff] %v1235
        %1268 = vst [vmem:[%s372 + $0x38] sm:$0xff] %v1236
        %1269 = vst [vmem:[%s372 + $0x40] sm:$0xff] %v1237
        %1270 = vst [vmem:[%s372 + $0x48] sm:$0xff] %v1238
        %1271 = vst [vmem:[%s372 + $0x50] sm:$0xff] %v1239
        %1272 = vst [vmem:[%s372 + $0x58] sm:$0xff] %v1240
        %1273 = vst [vmem:[%s372 + $0x60] sm:$0xff] %v1241
        %1274 = vst [vmem:[%s372 + $0x68] sm:$0xff] %v1242
        %1275 = vst [vmem:[%s372 + $0x70] sm:$0xff] %v1243
        %1276 = vst [vmem:[%s372 + $0x78] sm:$0xff] %v1244
        %s1277 = sand.u32 %s159, 1
        %s1278 = scalar_lea.sflag [#allocation4], %s1277
        %s1279 = sand.u32 %s159, 1
        %s1280 = smul.addr %s1279, 128
        %s1281 = scalar_lea.vmem [#allocation10], %s1280
        %s1282 = sand.u32 %s185, 1
        %s1283 = scalar_lea.sflag [#allocation12], %s1282
        %s1284 = sand.u32 %s185, 1
        %s1285 = smul.addr %s1284, 128
        %s1286 = scalar_lea.vmem [#allocation11], %s1285
        // Predicated region
        $region57: #{gpn_wo_b_forward.1} parent=39 // pred_check
          %p1287 = pneg %p169
        $region58: #{gpn_wo_b_forward.1} parent=39 // pred_check_branch
          %1289 = sbr.rel (%p1287) target = $region60
        $region59: #{gpn_wo_b_forward.1} parent=39 // pred_region
          %s1290 = smul.u32 16, %s31
          %s1292 = ssub.s32 2048, 2048
          %1293 = vsyncadd %s1278, %s1292
          %s1294 = smul.addr %s1290, 128
          %s1295 = scalar_lea.hbm %s5, %s1294
          %s1296 = sshll.u32 %s1281, 4
          %s1297 = int_to_ptr.vmem [resolvable:$true] %s1296
          %1302 = dma.vmem_to_hbm [thread:$0]  %s1297, 2048, %s1295, %s1278, 128, 128, 8
        $region60: #{gpn_wo_b_forward.1} parent=39 // pred_fallthru
          _
        // Predicated region
        $region61: #{gpn_wo_b_forward.1} parent=39 // pred_check
          %p1303 = pneg %p195
        $region62: #{gpn_wo_b_forward.1} parent=39 // pred_check_branch
          %1305 = sbr.rel (%p1303) target = $region64
        $region63: #{gpn_wo_b_forward.1} parent=39 // pred_region
          %s1306 = smul.u32 16, %s31
          %s1308 = ssub.s32 2048, 2048
          %1309 = vsyncadd %s1283, %s1308
          %s1310 = smul.addr %s1306, 128
          %s1311 = scalar_lea.hbm %s6, %s1310
          %s1312 = sshll.u32 %s1286, 4
          %s1313 = int_to_ptr.vmem [resolvable:$true] %s1312
          %1318 = dma.vmem_to_hbm [thread:$0]  %s1313, 2048, %s1311, %s1283, 128, 128, 8
        $region64: #{gpn_wo_b_forward.1} parent=39 // pred_fallthru
          _
      $region40: #{gpn_wo_b_forward.1} parent=5 // pred_fallthru
        _
      %p1319 = scmp.le.s32.totalorder 2, %s26
      // Predicated region
      $region65: #{gpn_wo_b_forward.1} parent=5 // pred_check
        %p1320 = pneg %p1319
      $region66: #{gpn_wo_b_forward.1} parent=5 // pred_check_branch
        %1322 = sbr.rel (%p1320) target = $region68
      $region67: #{gpn_wo_b_forward.1} parent=5 // pred_region
        %s1323 = ssub.s32 %s26, 2
        // Predicated region
        $region69: #{gpn_wo_b_forward.1} parent=67 // pred_check
          %p1324 = pneg %p175
        $region70: #{gpn_wo_b_forward.1} parent=67 // pred_check_branch
          %1326 = sbr.rel (%p1324) target = $region72
        $region71: #{gpn_wo_b_forward.1} parent=67 // pred_region
          %s1327 = sand.u32 %s160, 1
          %s1328 = scalar_lea.sflag [#allocation4], %s1327
          %s1329 = sand.u32 %s160, 1
          %s1330 = smul.addr %s1329, 128
          %s1331 = scalar_lea.vmem [#allocation10], %s1330
          %1332 = dma.done %s1328, 2048
        $region72: #{gpn_wo_b_forward.1} parent=67 // pred_fallthru
          _
        // Predicated region
        $region73: #{gpn_wo_b_forward.1} parent=67 // pred_check
          %p1333 = pneg %p201
        $region74: #{gpn_wo_b_forward.1} parent=67 // pred_check_branch
          %1335 = sbr.rel (%p1333) target = $region76
        $region75: #{gpn_wo_b_forward.1} parent=67 // pred_region
          %s1336 = sand.u32 %s186, 1
          %s1337 = scalar_lea.sflag [#allocation12], %s1336
          %s1338 = sand.u32 %s186, 1
          %s1339 = smul.addr %s1338, 128
          %s1340 = scalar_lea.vmem [#allocation11], %s1339
          %1341 = dma.done %s1337, 2048
        $region76: #{gpn_wo_b_forward.1} parent=67 // pred_fallthru
          _
      $region68: #{gpn_wo_b_forward.1} parent=5 // pred_fallthru
        _
    $region6: #{gpn_wo_b_forward.1} parent=1 // loop_footer
      %s30 = sadd.s32 1, %s26
    $region7: #{gpn_wo_b_forward.1} parent=1 // loop_footer_branch
      %25 = sbr.rel target = $region3
    $region8: #{gpn_wo_b_forward.1} parent=1 // loop_exit
      _
    %1342 = vsyncpa [#allocation3], 1
    %s1343 = scalar_lea.sflag [#allocation3], 1
    %1344 = vsyncpa %s1343, 1
    %1345 = vsyncpa [#allocation6], 1
    %s1346 = scalar_lea.sflag [#allocation6], 1
    %1347 = vsyncpa %s1346, 1
    %1348 = vsyncpa [#allocation9], 1
    %1349 = vsyncpa [#allocation4], 1
    %s1350 = scalar_lea.sflag [#allocation4], 1
    %1351 = vsyncpa %s1350, 1
    %1352 = vsyncpa [#allocation12], 1
    %s1353 = scalar_lea.sflag [#allocation12], 1
    %1354 = vsyncpa %s1353, 1

</llo_original>
